<compile_context>
chip_gen: v7x
topology: tpu7x:2x2x1
jax: 0.10.0
libtpu: 0.0.40
codegen_flags: <defaults>
</compile_context>

<pallas_src>
import jax
import jax.numpy as jnp
from jax.experimental import pallas as pl
from jax.experimental.pallas import tpu as pltpu


def _mlp_kernel(x_ref, w1_ref, b1_ref, w2_ref, b2_ref, w3_ref, b3_ref, o_ref):
    # x_ref:  [TILE_B, in_dim]  f32       (per-grid-step tile; cast in-kernel)
    # w1_ref: [in_dim, hidden]  bf16      (resident)
    # b1_ref: [1, hidden]       f32       (resident)
    # w2_ref: [hidden, hidden]  bf16      (resident)
    # b2_ref: [1, hidden]       f32       (resident)
    # w3_ref: [1, hidden]       f32       (resident, fc4 weight as a row)
    # b3_ref: [1, 1]            f32 SMEM  (scalar)
    # o_ref:  [TILE_B, 1]       f32

    # Layer 1: in-kernel bf16 cast (VPU, hidden under MXU), f32 accumulation.
    x_bf = x_ref[...].astype(jnp.bfloat16)
    h = jnp.dot(x_bf, w1_ref[...], preferred_element_type=jnp.float32)
    h = jnp.maximum(h + b1_ref[...], 0.0)

    # Layer 2: cast activations to bf16 for the MXU, accumulate in f32.
    h = jnp.dot(h.astype(jnp.bfloat16), w2_ref[...],
                preferred_element_type=jnp.float32)
    h = jnp.maximum(h + b2_ref[...], 0.0)

    # Layer 3 (N=1): VPU multiply + XLU lane-reduction instead of an MXU matmul.
    y = jnp.sum(h * w3_ref[...], axis=-1, keepdims=True) + b3_ref[0, 0]
    o_ref[...] = y.astype(o_ref.dtype)


def _round_up(n, m):
    return ((n + m - 1) // m) * m


def init_params(key, phi_dim, x_dim=3, hidden_dim=256):
    """Deterministic synthetic init (PyTorch-Linear-style uniform bounds).

    Weights are stored as [in_features, out_features] (transposed vs PyTorch)
    so each layer is y = x @ W + b.
    """
    in_dim = x_dim + phi_dim
    ks = jax.random.split(key, 6)

    def lin(kw, kb, fan_in, fan_out):
        bound = 1.0 / jnp.sqrt(fan_in)
        w = jax.random.uniform(kw, (fan_in, fan_out), jnp.float32, -bound, bound)
        b = jax.random.uniform(kb, (1, fan_out), jnp.float32, -bound, bound)
        return w, b

    w1, b1 = lin(ks[0], ks[1], in_dim, hidden_dim)
    w2, b2 = lin(ks[2], ks[3], hidden_dim, hidden_dim)
    w3, b3 = lin(ks[4], ks[5], hidden_dim, 1)
    return {"w1": w1, "b1": b1, "w2": w2, "b2": b2, "w3": w3, "b3": b3}


def prepare_params(params):
    """One-time weight preprocessing (hoisted out of the per-call wrapper):
    bf16 casts for the MXU layers, fc4 weight reshaped to a [1, hidden] f32 row
    for the VPU head, fc4 bias as a (1, 1) f32 SMEM scalar."""
    hidden = params["w1"].shape[1]
    return {
        "w1": params["w1"].astype(jnp.bfloat16),
        "b1": params["b1"].astype(jnp.float32),
        "w2": params["w2"].astype(jnp.bfloat16),
        "b2": params["b2"].astype(jnp.float32),
        "w3": params["w3"].reshape(1, hidden).astype(jnp.float32),
        "b3": params["b3"].reshape(1, 1).astype(jnp.float32),
    }


def classifier_forward(x, prepared, *, tile_b=2048):
    """x: [B, x_dim + phi_dim] float32. prepared: output of prepare_params.

    Returns [B, 1] float32 (same semantics as Classifier.forward).
    """
    w1, b1 = prepared["w1"], prepared["b1"]
    w2, b2 = prepared["w2"], prepared["b2"]
    w3, b3 = prepared["w3"], prepared["b3"]

    B, in_dim = x.shape
    hidden = w1.shape[1]

    # Batch tile: multiple of 8 (sublane), capped at tile_b, and also capped at
    # ceil(B/2) (sublane-aligned) so the grid has >=2 steps whenever B > 8 --
    # keeps both v7x TensorCores busy via the "parallel" axis.
    tile_b = max(8, _round_up(int(tile_b), 8))
    half_b = _round_up(max(pl.cdiv(B, 2), 1), 8)
    tile = min(tile_b, half_b)
    b_pad = _round_up(B, tile)
    if b_pad != B:
        x = jnp.pad(x, ((0, b_pad - B), (0, 0)))

    grid = (b_pad // tile,)

    # Advisory cost hint so XLA can schedule/overlap surrounding ops.
    flops = 2 * b_pad * (in_dim * hidden + hidden * hidden + hidden)
    bytes_accessed = (
        b_pad * in_dim * 4                       # x (f32, cast in-kernel)
        + (in_dim * hidden + hidden * hidden) * 2  # bf16 w1, w2
        + (2 * hidden + hidden + 1) * 4          # b1, b2, w3 row, b3 (f32)
        + b_pad * 4                              # output column
    )
    cost = pl.CostEstimate(flops=flops, transcendentals=0,
                           bytes_accessed=bytes_accessed)

    out = pl.pallas_call(
        _mlp_kernel,
        out_shape=jax.ShapeDtypeStruct((b_pad, 1), jnp.float32),
        grid=grid,
        in_specs=[
            pl.BlockSpec((tile, in_dim), lambda i: (i, 0)),        # x tile (f32)
            pl.BlockSpec((in_dim, hidden), lambda i: (0, 0)),      # w1 (resident)
            pl.BlockSpec((1, hidden), lambda i: (0, 0)),           # b1 (resident)
            pl.BlockSpec((hidden, hidden), lambda i: (0, 0)),      # w2 (resident)
            pl.BlockSpec((1, hidden), lambda i: (0, 0)),           # b2 (resident)
            pl.BlockSpec((1, hidden), lambda i: (0, 0)),           # w3 row (resident)
            pl.BlockSpec(memory_space=pltpu.MemorySpace.SMEM),     # b3 scalar
        ],
        out_specs=pl.BlockSpec((tile, 1), lambda i: (i, 0)),
        compiler_params=pltpu.CompilerParams(
            dimension_semantics=("parallel",),                     # megacore on v7x
        ),
        cost_estimate=cost,
    )(x, w1, b1, w2, b2, w3, b3)

    return out[:B]


def _reference(x, p):
    # Pure-f32 reference of the PyTorch forward pass.
    h = jnp.maximum(x @ p["w1"] + p["b1"], 0.0)
    h = jnp.maximum(h @ p["w2"] + p["b2"], 0.0)
    return h @ p["w3"] + p["b3"]


if __name__ == "__main__":
    key = jax.random.PRNGKey(0)
    k_param, k_x = jax.random.split(key)

    # Small shapes consistent with the module: x_dim=3, phi_dim=29 -> in_dim=32,
    # hidden_dim=256 (module default), batch=20.
    phi_dim, x_dim, hidden_dim, batch = 29, 3, 256, 20
    params = init_params(k_param, phi_dim, x_dim=x_dim, hidden_dim=hidden_dim)
    prepared = prepare_params(params)   # one-time weight preprocessing
    x = jax.random.normal(k_x, (batch, x_dim + phi_dim), jnp.float32)

    ref = _reference(x, params)

    # Run 1: default tile_b -> tile capped at ceil(B/2)=16, grid=(2,) (the
    # >=2-step megacore path, with batch padding 20 -> 32).
    out_default = jax.block_until_ready(classifier_forward(x, prepared))
    # Run 2: explicit small tile_b=8 -> grid=(3,), exercises multi-step + clamp.
    out_small = jax.block_until_ready(
        classifier_forward(x, prepared, tile_b=8))

    assert out_default.shape == (batch, 1)
    assert out_small.shape == (batch, 1)
    # bf16 matmul inputs (f32 accumulation) -> looser-than-f32 tolerance.
    assert jnp.allclose(out_default, ref, atol=2e-2, rtol=2e-2), float(
        jnp.max(jnp.abs(out_default - ref)))
    assert jnp.allclose(out_small, ref, atol=2e-2, rtol=2e-2), float(
        jnp.max(jnp.abs(out_small - ref)))
    print("KERNEL_OK")
</pallas_src>

<mosaic_0001>
module attributes {stable_mosaic.version = 11 : i64} {
  func.func @_mlp_kernel(%arg0: i32, %arg1: memref<16x32xf32, #tpu.memory_space<vmem>>, %arg2: memref<32x256xbf16, #tpu.memory_space<vmem>>, %arg3: memref<1x256xf32, #tpu.memory_space<vmem>>, %arg4: memref<256x256xbf16, #tpu.memory_space<vmem>>, %arg5: memref<1x256xf32, #tpu.memory_space<vmem>>, %arg6: memref<1x256xf32, #tpu.memory_space<vmem>>, %arg7: memref<1x1xf32, #tpu.memory_space<smem>>, %arg8: memref<16x1xf32, #tpu.memory_space<vmem>>) attributes {dimension_semantics = [#tpu.dimension_semantics<parallel>], iteration_bounds = array<i64: 2>, scalar_prefetch = 0 : i64, scratch_operands = 0 : i64, tpu.core_type = #tpu.core_type<tc>, window_params = [{transform_indices = @transform_0, window_bounds = array<i64: 16, 32>}, {pipeline_mode = #tpu.pipeline_mode<synchronous>, transform_indices = @transform_1, window_bounds = array<i64: 32, 256>}, {pipeline_mode = #tpu.pipeline_mode<synchronous>, transform_indices = @transform_2, window_bounds = array<i64: 1, 256>}, {pipeline_mode = #tpu.pipeline_mode<synchronous>, transform_indices = @transform_3, window_bounds = array<i64: 256, 256>}, {pipeline_mode = #tpu.pipeline_mode<synchronous>, transform_indices = @transform_4, window_bounds = array<i64: 1, 256>}, {pipeline_mode = #tpu.pipeline_mode<synchronous>, transform_indices = @transform_5, window_bounds = array<i64: 1, 256>}, {transform_indices = @transform_6, window_bounds = array<i64: 1, 1>}, {transform_indices = @transform_7, window_bounds = array<i64: 16, 1>}]} {
    %c0 = arith.constant 0 : index
    %c0_0 = arith.constant 0 : index
    %0 = vector.load %arg1[%c0, %c0_0] : memref<16x32xf32, #tpu.memory_space<vmem>>, vector<16x32xf32>
    %1 = arith.truncf %0 : vector<16x32xf32> to vector<16x32xbf16>
    %c0_1 = arith.constant 0 : index
    %c0_2 = arith.constant 0 : index
    %2 = vector.load %arg2[%c0_1, %c0_2] : memref<32x256xbf16, #tpu.memory_space<vmem>>, vector<32x256xbf16>
    %cst = arith.constant dense<0.000000e+00> : vector<16x256xf32>
    %3 = tpu.matmul %1, %2, %cst {dimension_numbers = #tpu.dot_dimension_numbers<[1], [0], [0], [1], [0, 0, 1, 1], [], []>} : vector<16x32xbf16>, vector<32x256xbf16>, vector<16x256xf32> -> vector<16x256xf32>
    %c0_3 = arith.constant 0 : index
    %c0_4 = arith.constant 0 : index
    %4 = vector.load %arg3[%c0_3, %c0_4] : memref<1x256xf32, #tpu.memory_space<vmem>>, vector<1x256xf32>
    %5 = vector.broadcast %4 : vector<1x256xf32> to vector<16x256xf32>
    %6 = arith.addf %3, %5 : vector<16x256xf32>
    %cst_5 = arith.constant 0.000000e+00 : f32
    %7 = vector.broadcast %cst_5 : f32 to vector<16x256xf32>
    %8 = arith.maximumf %6, %7 : vector<16x256xf32>
    %9 = arith.truncf %8 : vector<16x256xf32> to vector<16x256xbf16>
    %c0_6 = arith.constant 0 : index
    %c0_7 = arith.constant 0 : index
    %10 = vector.load %arg4[%c0_6, %c0_7] : memref<256x256xbf16, #tpu.memory_space<vmem>>, vector<256x256xbf16>
    %cst_8 = arith.constant dense<0.000000e+00> : vector<16x256xf32>
    %11 = tpu.matmul %9, %10, %cst_8 {dimension_numbers = #tpu.dot_dimension_numbers<[1], [0], [0], [1], [0, 0, 1, 1], [], []>} : vector<16x256xbf16>, vector<256x256xbf16>, vector<16x256xf32> -> vector<16x256xf32>
    %c0_9 = arith.constant 0 : index
    %c0_10 = arith.constant 0 : index
    %12 = vector.load %arg5[%c0_9, %c0_10] : memref<1x256xf32, #tpu.memory_space<vmem>>, vector<1x256xf32>
    %13 = vector.broadcast %12 : vector<1x256xf32> to vector<16x256xf32>
    %14 = arith.addf %11, %13 : vector<16x256xf32>
    %cst_11 = arith.constant 0.000000e+00 : f32
    %15 = vector.broadcast %cst_11 : f32 to vector<16x256xf32>
    %16 = arith.maximumf %14, %15 : vector<16x256xf32>
    %c0_12 = arith.constant 0 : index
    %c0_13 = arith.constant 0 : index
    %17 = vector.load %arg6[%c0_12, %c0_13] : memref<1x256xf32, #tpu.memory_space<vmem>>, vector<1x256xf32>
    %18 = vector.broadcast %17 : vector<1x256xf32> to vector<16x256xf32>
    %19 = arith.mulf %16, %18 : vector<16x256xf32>
    %cst_14 = arith.constant dense<0.000000e+00> : vector<16xf32>
    %20 = vector.multi_reduction <add>, %19, %cst_14 [1] : vector<16x256xf32> to vector<16xf32>
    %21 = vector.shape_cast %20 : vector<16xf32> to vector<16x1xf32>
    %c0_15 = arith.constant 0 : index
    %c0_16 = arith.constant 0 : index
    %22 = memref.load %arg7[%c0_15, %c0_16] : memref<1x1xf32, #tpu.memory_space<smem>>
    %23 = vector.broadcast %22 : f32 to vector<16x1xf32>
    %24 = arith.addf %21, %23 : vector<16x1xf32>
    %c0_17 = arith.constant 0 : index
    %c0_18 = arith.constant 0 : index
    %25 = vector.load %arg8[%c0_17, %c0_18] : memref<16x1xf32, #tpu.memory_space<vmem>>, vector<16x1xf32>
    tpu.vector_store %arg8[%c0_17, %c0_18], %24 {strides = array<i32>} : memref<16x1xf32, #tpu.memory_space<vmem>>, vector<16x1xf32>,
    return
  }
  func.func @transform_0(%arg0: i32) -> (i32, i32) {
    %c0_i32 = arith.constant 0 : i32
    %c0_i32_0 = arith.constant 0 : i32
    return %arg0, %c0_i32 : i32, i32
  }
  func.func @transform_1(%arg0: i32) -> (i32, i32) {
    %c0_i32 = arith.constant 0 : i32
    %c0_i32_0 = arith.constant 0 : i32
    %c0_i32_1 = arith.constant 0 : i32
    return %c0_i32, %c0_i32_0 : i32, i32
  }
  func.func @transform_2(%arg0: i32) -> (i32, i32) {
    %c0_i32 = arith.constant 0 : i32
    %c0_i32_0 = arith.constant 0 : i32
    %c0_i32_1 = arith.constant 0 : i32
    return %c0_i32, %c0_i32_0 : i32, i32
  }
  func.func @transform_3(%arg0: i32) -> (i32, i32) {
    %c0_i32 = arith.constant 0 : i32
    %c0_i32_0 = arith.constant 0 : i32
    %c0_i32_1 = arith.constant 0 : i32
    return %c0_i32, %c0_i32_0 : i32, i32
  }
  func.func @transform_4(%arg0: i32) -> (i32, i32) {
    %c0_i32 = arith.constant 0 : i32
    %c0_i32_0 = arith.constant 0 : i32
    %c0_i32_1 = arith.constant 0 : i32
    return %c0_i32, %c0_i32_0 : i32, i32
  }
  func.func @transform_5(%arg0: i32) -> (i32, i32) {
    %c0_i32 = arith.constant 0 : i32
    %c0_i32_0 = arith.constant 0 : i32
    %c0_i32_1 = arith.constant 0 : i32
    return %c0_i32, %c0_i32_0 : i32, i32
  }
  func.func @transform_6(%arg0: i32) -> (i32, i32) {
    %c0_i32 = arith.constant 0 : i32
    %c0_i32_0 = arith.constant 0 : i32
    %c0_i32_1 = arith.constant 0 : i32
    return %c0_i32, %c0_i32_0 : i32, i32
  }
  func.func @transform_7(%arg0: i32) -> (i32, i32) {
    %c0_i32 = arith.constant 0 : i32
    %c0_i32_0 = arith.constant 0 : i32
    return %arg0, %c0_i32 : i32, i32
  }
}

</mosaic_0001>

<llo_original>
// kernel: tpu_custom_call.1
$region0: #{tpu_custom_call.1}
  #allocation0 [shape = 'u32[]', space=smem, size = 0x4, offset = 0x4, fixed_abs, tag = 'smem constant byte address 0x4 - core index']
  #allocation1 [shape = 'u32[144,128]{1,0:T(1,128)}', space=vmem, size = 0x12000, scoped, tag = 'internal scratch']
  #allocation2 [shape = 'f32[1,1]{1,0:T(1,128)S(6)}', space=smem, size = 0x200, scoped, tag = 'scoped memory for tpu_custom_call.1']
  %s0 = inlined_call_operand.hbm [shape: f32[32,32], index: 0, kind: input, shape index: {}]
  %s1 = inlined_call_operand.hbm [shape: bf16[32,256], index: 1, kind: input, shape index: {}]
  %s2 = inlined_call_operand.vmem [shape: f32[1,256], index: 2, kind: input, shape index: {}]
  %s3 = inlined_call_operand.hbm [shape: bf16[256,256], index: 3, kind: input, shape index: {}]
  %s4 = inlined_call_operand.vmem [shape: f32[1,256], index: 4, kind: input, shape index: {}]
  %s5 = inlined_call_operand.vmem [shape: f32[1,256], index: 5, kind: input, shape index: {}]
  %s6 = inlined_call_operand.<no memory space> [shape: f32[1,1], index: 6, kind: input, shape index: {}]
  %s7 = inlined_call_operand.vmem [shape: f32[32,1], index: 7, kind: output, shape index: {}]
  %s8 = sld [smem:[#allocation0]]
  $region73: #{tpu_custom_call.1} parent=0
    _
  %s10 = ssub.s32 1, %s8
  %s11 = scalar_select 0, %s10, %s8
  %12 = sst [smem:[#allocation2]] %s6
  $region1: #{tpu_custom_call.1} parent=0
    #allocation3 [shape = 'u8[16384]{0}', space=vmem, size = 0x4000, scoped, tag = 'input window, operand 0']
    #allocation4 [shape = 's32[2]{0}', space=sflag, size = 0x8, scoped, tag = 'scoped memory for tpu_custom_call.1']
    #allocation5 [shape = 'u8[16384]{0}', space=vmem, size = 0x4000, scoped, tag = 'input window, operand 1, single buffered']
    #allocation6 [shape = 's32[1]{0}', space=sflag, size = 0x4, scoped, tag = 'scoped memory for tpu_custom_call.1']
    #allocation7 [shape = 'u8[131072]{0}', space=vmem, size = 0x20000, scoped, tag = 'input window, operand 3, single buffered']
    %13 = vsyncpa [#allocation4], 0
    %s14 = scalar_lea.sflag [#allocation4], 1
    %15 = vsyncpa %s14, 0
    %16 = vsyncpa [#allocation6], 0
    loop: start=0, step=1, limit=4
    $region2: #{tpu_custom_call.1} parent=1 // loop_pre_header
      _
    $region3: #{tpu_custom_call.1} parent=1 // loop_header
      %s18 = sphi 0, %s22
      %p19 = scmp.ge.s32.totalorder %s18, 4
      %s28 = sphi 0, %s30
      %s31 = sphi 0, %s28
      %s32 = sphi 0, %s31
      %s48 = sphi 0, %s32
      %s52 = sphi 0, %s52
      %s54 = sphi 0, %s52
      %s55 = sphi 0, %s54
      %s69 = sphi 0, %s55
      %s73 = sphi 0, %s73
      %s75 = sphi 0, %s73
      %s76 = sphi 0, %s75
      %s90 = sphi 0, %s76
      %s94 = sphi 0, %s94
      %s96 = sphi 0, %s94
      %s97 = sphi 0, %s96
      %s111 = sphi 0, %s97
      %s115 = sphi 0, %s115
      %s117 = sphi 0, %s115
      %s118 = sphi 0, %s117
      %s132 = sphi 0, %s118
      %s136 = sphi 0, %s136
      %s138 = sphi 0, %s136
      %s139 = sphi 0, %s138
      %s153 = sphi 0, %s139
      %s157 = sphi 0, %s157
      %s159 = sphi 0, %s157
      %s160 = sphi 0, %s159
      %s174 = sphi 0, %s160
      %s180 = sphi 0, %s182
      %s183 = sphi 0, %s180
      %s184 = sphi 0, %s183
      %s200 = sphi 0, %s184
    $region4: #{tpu_custom_call.1} parent=1 // loop_header_branch
      %21 = sbr.rel (%p19) target = $region8
    $region5: #{tpu_custom_call.1} parent=1 // loop_body
      %s23 = ssub.s32 %s18, 1
      %s24 = ssub.s32 %s18, 2
      %s25 = sadd.s32 %s18, 1
      %s26 = ssub.s32 %s18, %s25
      %p27 = scmp.eq.s32.totalorder %s26, 0
      %s29 = sadd.s32 %s28, 1
      %s30 = scalar_select %p27, %s28, %s29
      %p33 = pneg %p27
      %p34 = scmp.eq.s32.totalorder %s18, 1
      %p35 = por %p33, %p34
      %p36 = scmp.ne.s32.totalorder %s28, %s31
      %p37 = scmp.eq.s32.totalorder %s18, 0
      %p38 = por %p36, %p37
      %p39 = scmp.ne.s32.totalorder %s28, %s31
      %p40 = scmp.eq.s32.totalorder %s23, 1
      %p41 = por %p39, %p40
      %p42 = scmp.ne.s32.totalorder %s31, %s32
      %p43 = scmp.eq.s32.totalorder %s23, 0
      %p44 = por %p42, %p43
      %p45 = scmp.ne.s32.totalorder %s31, %s32
      %p46 = scmp.eq.s32.totalorder %s24, 1
      %p47 = por %p45, %p46
      %p49 = scmp.ne.s32.totalorder %s32, %s48
      %p50 = scmp.eq.s32.totalorder %s24, 0
      %p51 = por %p49, %p50
      %s53 = sadd.s32 %s52, 1
      %p56 = scmp.eq.s32.totalorder %s18, 1
      %p57 = scmp.ne.s32.totalorder %s52, %s54
      %p58 = scmp.eq.s32.totalorder %s18, 0
      %p59 = por %p57, %p58
      %p60 = scmp.ne.s32.totalorder %s52, %s54
      %p61 = scmp.eq.s32.totalorder %s23, 1
      %p62 = por %p60, %p61
      %p63 = scmp.ne.s32.totalorder %s54, %s55
      %p64 = scmp.eq.s32.totalorder %s23, 0
      %p65 = por %p63, %p64
      %p66 = scmp.ne.s32.totalorder %s54, %s55
      %p67 = scmp.eq.s32.totalorder %s24, 1
      %p68 = por %p66, %p67
      %p70 = scmp.ne.s32.totalorder %s55, %s69
      %p71 = scmp.eq.s32.totalorder %s24, 0
      %p72 = por %p70, %p71
      %s74 = sadd.s32 %s73, 1
      %p77 = scmp.eq.s32.totalorder %s18, 1
      %p78 = scmp.ne.s32.totalorder %s73, %s75
      %p79 = scmp.eq.s32.totalorder %s18, 0
      %p80 = por %p78, %p79
      %p81 = scmp.ne.s32.totalorder %s73, %s75
      %p82 = scmp.eq.s32.totalorder %s23, 1
      %p83 = por %p81, %p82
      %p84 = scmp.ne.s32.totalorder %s75, %s76
      %p85 = scmp.eq.s32.totalorder %s23, 0
      %p86 = por %p84, %p85
      %p87 = scmp.ne.s32.totalorder %s75, %s76
      %p88 = scmp.eq.s32.totalorder %s24, 1
      %p89 = por %p87, %p88
      %p91 = scmp.ne.s32.totalorder %s76, %s90
      %p92 = scmp.eq.s32.totalorder %s24, 0
      %p93 = por %p91, %p92
      %s95 = sadd.s32 %s94, 1
      %p98 = scmp.eq.s32.totalorder %s18, 1
      %p99 = scmp.ne.s32.totalorder %s94, %s96
      %p100 = scmp.eq.s32.totalorder %s18, 0
      %p101 = por %p99, %p100
      %p102 = scmp.ne.s32.totalorder %s94, %s96
      %p103 = scmp.eq.s32.totalorder %s23, 1
      %p104 = por %p102, %p103
      %p105 = scmp.ne.s32.totalorder %s96, %s97
      %p106 = scmp.eq.s32.totalorder %s23, 0
      %p107 = por %p105, %p106
      %p108 = scmp.ne.s32.totalorder %s96, %s97
      %p109 = scmp.eq.s32.totalorder %s24, 1
      %p110 = por %p108, %p109
      %p112 = scmp.ne.s32.totalorder %s97, %s111
      %p113 = scmp.eq.s32.totalorder %s24, 0
      %p114 = por %p112, %p113
      %s116 = sadd.s32 %s115, 1
      %p119 = scmp.eq.s32.totalorder %s18, 1
      %p120 = scmp.ne.s32.totalorder %s115, %s117
      %p121 = scmp.eq.s32.totalorder %s18, 0
      %p122 = por %p120, %p121
      %p123 = scmp.ne.s32.totalorder %s115, %s117
      %p124 = scmp.eq.s32.totalorder %s23, 1
      %p125 = por %p123, %p124
      %p126 = scmp.ne.s32.totalorder %s117, %s118
      %p127 = scmp.eq.s32.totalorder %s23, 0
      %p128 = por %p126, %p127
      %p129 = scmp.ne.s32.totalorder %s117, %s118
      %p130 = scmp.eq.s32.totalorder %s24, 1
      %p131 = por %p129, %p130
      %p133 = scmp.ne.s32.totalorder %s118, %s132
      %p134 = scmp.eq.s32.totalorder %s24, 0
      %p135 = por %p133, %p134
      %s137 = sadd.s32 %s136, 1
      %p140 = scmp.eq.s32.totalorder %s18, 1
      %p141 = scmp.ne.s32.totalorder %s136, %s138
      %p142 = scmp.eq.s32.totalorder %s18, 0
      %p143 = por %p141, %p142
      %p144 = scmp.ne.s32.totalorder %s136, %s138
      %p145 = scmp.eq.s32.totalorder %s23, 1
      %p146 = por %p144, %p145
      %p147 = scmp.ne.s32.totalorder %s138, %s139
      %p148 = scmp.eq.s32.totalorder %s23, 0
      %p149 = por %p147, %p148
      %p150 = scmp.ne.s32.totalorder %s138, %s139
      %p151 = scmp.eq.s32.totalorder %s24, 1
      %p152 = por %p150, %p151
      %p154 = scmp.ne.s32.totalorder %s139, %s153
      %p155 = scmp.eq.s32.totalorder %s24, 0
      %p156 = por %p154, %p155
      %s158 = sadd.s32 %s157, 1
      %p161 = scmp.eq.s32.totalorder %s18, 1
      %p162 = scmp.ne.s32.totalorder %s157, %s159
      %p163 = scmp.eq.s32.totalorder %s18, 0
      %p164 = por %p162, %p163
      %p165 = scmp.ne.s32.totalorder %s157, %s159
      %p166 = scmp.eq.s32.totalorder %s23, 1
      %p167 = por %p165, %p166
      %p168 = scmp.ne.s32.totalorder %s159, %s160
      %p169 = scmp.eq.s32.totalorder %s23, 0
      %p170 = por %p168, %p169
      %p171 = scmp.ne.s32.totalorder %s159, %s160
      %p172 = scmp.eq.s32.totalorder %s24, 1
      %p173 = por %p171, %p172
      %p175 = scmp.ne.s32.totalorder %s160, %s174
      %p176 = scmp.eq.s32.totalorder %s24, 0
      %p177 = por %p175, %p176
      %s178 = ssub.s32 %s18, %s25
      %p179 = scmp.eq.s32.totalorder %s178, 0
      %s181 = sadd.s32 %s180, 1
      %s182 = scalar_select %p179, %s180, %s181
      %p185 = pneg %p179
      %p186 = scmp.eq.s32.totalorder %s18, 1
      %p187 = por %p185, %p186
      %p188 = scmp.ne.s32.totalorder %s180, %s183
      %p189 = scmp.eq.s32.totalorder %s18, 0
      %p190 = por %p188, %p189
      %p191 = scmp.ne.s32.totalorder %s180, %s183
      %p192 = scmp.eq.s32.totalorder %s23, 1
      %p193 = por %p191, %p192
      %p194 = scmp.ne.s32.totalorder %s183, %s184
      %p195 = scmp.eq.s32.totalorder %s23, 0
      %p196 = por %p194, %p195
      %p197 = scmp.ne.s32.totalorder %s183, %s184
      %p198 = scmp.eq.s32.totalorder %s24, 1
      %p199 = por %p197, %p198
      %p201 = scmp.ne.s32.totalorder %s184, %s200
      %p202 = scmp.eq.s32.totalorder %s24, 0
      %p203 = por %p201, %p202
      %p204 = scmp.le.s32.totalorder 1, %s18
      %p205 = scmp.lt.s32.totalorder %s18, 3
      %p206 = pnand %p204, %p205
      %p207 = pneg %p206
      // Predicated region
      $region9: #{tpu_custom_call.1} parent=5 // pred_check
        _
      $region10: #{tpu_custom_call.1} parent=5 // pred_check_branch
        %209 = sbr.rel (%p206) target = $region12
      $region11: #{tpu_custom_call.1} parent=5 // pred_region
        %s210 = ssub.s32 %s18, 1
        // Predicated region
        $region13: #{tpu_custom_call.1} parent=11 // pred_check
          %p211 = pneg %p65
        $region14: #{tpu_custom_call.1} parent=11 // pred_check_branch
          %213 = sbr.rel (%p211) target = $region16
        $region15: #{tpu_custom_call.1} parent=11 // pred_region
          %s215 = ssub.s32 512, 512
          %216 = vsyncadd [#allocation6], %s215
          %s217 = sshll.u32 [#allocation5], 4
          %s218 = int_to_ptr.vmem [resolvable:$true] %s217
          %223 = dma.hbm_to_vmem [thread:$0]  %s1, 512, %s218, [#allocation6], 128, 128, 8
        $region16: #{tpu_custom_call.1} parent=11 // pred_fallthru
          _
        // Predicated region
        $region17: #{tpu_custom_call.1} parent=11 // pred_check
          %p224 = pneg %p86
        $region18: #{tpu_custom_call.1} parent=11 // pred_check_branch
          %226 = sbr.rel (%p224) target = $region20
        $region19: #{tpu_custom_call.1} parent=11 // pred_region
          _
        $region20: #{tpu_custom_call.1} parent=11 // pred_fallthru
          _
        // Predicated region
        $region21: #{tpu_custom_call.1} parent=11 // pred_check
          %p227 = pneg %p107
        $region22: #{tpu_custom_call.1} parent=11 // pred_check_branch
          %229 = sbr.rel (%p227) target = $region24
        $region23: #{tpu_custom_call.1} parent=11 // pred_region
          %s231 = ssub.s32 4096, 4096
          %232 = vsyncadd [#allocation6], %s231
          %s233 = sshll.u32 [#allocation7], 4
          %s234 = int_to_ptr.vmem [resolvable:$true] %s233
          %239 = dma.hbm_to_vmem [thread:$0]  %s3, 4096, %s234, [#allocation6], 128, 128, 8
        $region24: #{tpu_custom_call.1} parent=11 // pred_fallthru
          _
        // Predicated region
        $region25: #{tpu_custom_call.1} parent=11 // pred_check
          %p240 = pneg %p128
        $region26: #{tpu_custom_call.1} parent=11 // pred_check_branch
          %242 = sbr.rel (%p240) target = $region28
        $region27: #{tpu_custom_call.1} parent=11 // pred_region
          _
        $region28: #{tpu_custom_call.1} parent=11 // pred_fallthru
          _
        // Predicated region
        $region29: #{tpu_custom_call.1} parent=11 // pred_check
          %p243 = pneg %p149
        $region30: #{tpu_custom_call.1} parent=11 // pred_check_branch
          %245 = sbr.rel (%p243) target = $region32
        $region31: #{tpu_custom_call.1} parent=11 // pred_region
          _
        $region32: #{tpu_custom_call.1} parent=11 // pred_fallthru
          _
        // Predicated region
        $region33: #{tpu_custom_call.1} parent=11 // pred_check
          %p246 = pneg %p170
        $region34: #{tpu_custom_call.1} parent=11 // pred_check_branch
          %248 = sbr.rel (%p246) target = $region36
        $region35: #{tpu_custom_call.1} parent=11 // pred_region
          _
        $region36: #{tpu_custom_call.1} parent=11 // pred_fallthru
          _
      $region12: #{tpu_custom_call.1} parent=5 // pred_fallthru
        _
      %p249 = scmp.lt.s32.totalorder %s18, 2
      // Predicated region
      $region37: #{tpu_custom_call.1} parent=5 // pred_check
        %p250 = pneg %p249
      $region38: #{tpu_custom_call.1} parent=5 // pred_check_branch
        %252 = sbr.rel (%p250) target = $region40
      $region39: #{tpu_custom_call.1} parent=5 // pred_region
        // Predicated region
        $region41: #{tpu_custom_call.1} parent=39 // pred_check
          %p253 = pneg %p38
        $region42: #{tpu_custom_call.1} parent=39 // pred_check_branch
          %255 = sbr.rel (%p253) target = $region44
        $region43: #{tpu_custom_call.1} parent=39 // pred_region
          %s256 = sand.u32 %s28, 1
          %s257 = scalar_lea.sflag [#allocation4], %s256
          %s258 = sand.u32 %s28, 1
          %s259 = smul.addr %s258, 16
          %s260 = scalar_lea.vmem [#allocation3], %s259
          %s261 = smul.u32 2, %s18
          %s263 = ssub.s32 256, 256
          %264 = vsyncadd %s257, %s263
          %s265 = smul.addr %s261, 128
          %s266 = scalar_lea.hbm %s0, %s265
          %s267 = sshll.u32 %s260, 4
          %s268 = int_to_ptr.vmem [resolvable:$true] %s267
          %273 = dma.hbm_to_vmem [thread:$0]  %s266, 256, %s268, %s257, 128, 128, 8
        $region44: #{tpu_custom_call.1} parent=39 // pred_fallthru
          _
      $region40: #{tpu_custom_call.1} parent=5 // pred_fallthru
        _
      %p274 = scmp.le.s32.totalorder 1, %s18
      %p275 = scmp.lt.s32.totalorder %s18, 3
      %p276 = pnand %p274, %p275
      %p277 = pneg %p276
      // Predicated region
      $region45: #{tpu_custom_call.1} parent=5 // pred_check
        _
      $region46: #{tpu_custom_call.1} parent=5 // pred_check_branch
        %279 = sbr.rel (%p276) target = $region48
      $region47: #{tpu_custom_call.1} parent=5 // pred_region
        %s280 = ssub.s32 %s18, 1
        %s281 = sand.u32 %s31, 1
        %s282 = scalar_lea.sflag [#allocation4], %s281
        %s283 = sand.u32 %s31, 1
        %s284 = smul.addr %s283, 16
        %s285 = scalar_lea.vmem [#allocation3], %s284
        // Predicated region
        $region49: #{tpu_custom_call.1} parent=47 // pred_check
          %p286 = pneg %p44
        $region50: #{tpu_custom_call.1} parent=47 // pred_check_branch
          %288 = sbr.rel (%p286) target = $region52
        $region51: #{tpu_custom_call.1} parent=47 // pred_region
          %289 = dma.done %s282, 256
        $region52: #{tpu_custom_call.1} parent=47 // pred_fallthru
          _
        // Predicated region
        $region53: #{tpu_custom_call.1} parent=47 // pred_check
          %p290 = pneg %p65
        $region54: #{tpu_custom_call.1} parent=47 // pred_check_branch
          %292 = sbr.rel (%p290) target = $region56
        $region55: #{tpu_custom_call.1} parent=47 // pred_region
          %293 = dma.done [#allocation6], 512
        $region56: #{tpu_custom_call.1} parent=47 // pred_fallthru
          _
        // Predicated region
        $region57: #{tpu_custom_call.1} parent=47 // pred_check
          %p294 = pneg %p107
        $region58: #{tpu_custom_call.1} parent=47 // pred_check_branch
          %296 = sbr.rel (%p294) target = $region60
        $region59: #{tpu_custom_call.1} parent=47 // pred_region
          %297 = dma.done [#allocation6], 4096
        $region60: #{tpu_custom_call.1} parent=47 // pred_fallthru
          _
        %s298 = sand.u32 %s31, 1
        %s299 = scalar_lea.sflag [#allocation4], %s298
        %s300 = sand.u32 %s31, 1
        %s301 = smul.addr %s300, 16
        %s302 = scalar_lea.vmem [#allocation3], %s301
        %p303 = pneg %p44
        %p304 = pneg %p41
        %p305 = pneg %p65
        %p306 = pneg %p62
        %p307 = pneg %p86
        %p308 = pneg %p83
        %p309 = pneg %p107
        %p310 = pneg %p104
        %p311 = pneg %p128
        %p312 = pneg %p125
        %p313 = pneg %p149
        %p314 = pneg %p146
        %p315 = pneg %p170
        %p316 = pneg %p167
        %p317 = pneg %p196
        %p318 = pneg %p193
        %s319 = smul.u32 2, %s23
        %p320 = scmp.lt.s32.totalorder %s319, 3
        %s321 = scalar_select %p320, %s319, 3
        %s322 = smul.addr %s321, 8
        %s323 = scalar_lea.vmem %s7, %s322
        %s324 = smul.u32 2, %s23
        %s325 = smul.u32 2, %s23
        %p326 = scmp.lt.s32.totalorder %s325, 3
        %s327 = scalar_select %p326, %s325, 3
        %s328 = smul.addr %s327, 8
        %s329 = scalar_lea.vmem %s7, %s328
        %s330 = smul.u32 2, %s23
        %v332 = vld [vmem:[%s285] sm:$0xff]
        %v333 = vld [vmem:[%s285 + $0x8] sm:$0xff]
        %v334 = vpack.c.bf16 %v333, %v332
        %v335 = vld [vmem:[#allocation5] sm:$0xff]
        %v336 = vld [vmem:[#allocation5 + $0x8] sm:$0xff]
        %v337 = vld [vmem:[#allocation5 + $0x10] sm:$0xff]
        %v338 = vld [vmem:[#allocation5 + $0x18] sm:$0xff]
        %v339 = vld [vmem:[%s2] sm:$0x3]
        %v341 = vlaneseq
        %v342 = vshrl.u32 %v341, 7
        %v343 = vsub.s32 0, %v342
        %v344 = vrot.slane %v339, %v343
        %v345 = vlaneseq
        %v346 = vshrl.u32 %v345, 7
        %v347 = vsub.s32 1, %v346
        %v348 = vrot.slane %v339, %v347
        %v355 = vunpack.c.l.b16 %v335
        %v356 = vunpack.c.h.b16 %v335
        %v357 = vunpack.c.l.b16 %v336
        %v358 = vunpack.c.h.b16 %v336
        %v359 = vunpack.c.l.b16 %v337
        %v360 = vunpack.c.h.b16 %v337
        %v361 = vunpack.c.l.b16 %v338
        %v362 = vunpack.c.h.b16 %v338
        %v363 = vpack.c.b16 %v357, %v355
        %v364 = vpack.c.b16 %v358, %v356
        %v365 = vpack.c.b16 %v361, %v359
        %v366 = vpack.c.b16 %v362, %v360
        %vm371 = vcmask 261120
        %v373 = vsel %vm371, %v334, 0
        %375 = vmatprep.subr.bf16.mxu0 %v364
        %376 = vmatpush1.bf16.msra.mxu0 %v363
        %377 = vmatprep.subr.bf16.mxu0 %v366
        %378 = vmatpush1.bf16.msra.mxu0 %v365
        %379 = vmatprep.subr.bf16.mxu0 0
        %380 = vmatpush1.bf16.msra.mxu0 0
        %381 = vmatprep.subr.bf16.mxu0 0
        %382 = vmatpush1.bf16.msra.mxu0 0
        %383 = vmatprep.subr.bf16.mxu0 0
        %384 = vmatpush1.bf16.msra.mxu0 0
        %385 = vmatprep.subr.bf16.mxu0 0
        %386 = vmatpush1.bf16.msra.mxu0 0
        %387 = vmatprep.subr.bf16.mxu0 0
        %388 = vmatpush1.bf16.msra.mxu0 0
        %389 = vmatprep.subr.bf16.mxu0 0
        %390 = vmatpush1.bf16.msra.mxu0 0
        %391 = vmatprep.subr.bf16.mxu0 0
        %392 = vmatpush1.bf16.msra.mxu0 0
        %393 = vmatprep.subr.bf16.mxu0 0
        %394 = vmatpush1.bf16.msra.mxu0 0
        %395 = vmatprep.subr.bf16.mxu0 0
        %396 = vmatpush1.bf16.msra.mxu0 0
        %397 = vmatprep.subr.bf16.mxu0 0
        %398 = vmatpush1.bf16.msra.mxu0 0
        %399 = vmatprep.subr.bf16.mxu0 0
        %400 = vmatpush1.bf16.msra.mxu0 0
        %401 = vmatprep.subr.bf16.mxu0 0
        %402 = vmatpush1.bf16.msra.mxu0 0
        %403 = vmatprep.subr.bf16.mxu0 0
        %404 = vmatpush1.bf16.msra.mxu0 0
        %405 = vmatprep.subr.bf16.mxu0 0
        %406 = vmatpush1.bf16.msra.mxu0 0
        %407 = vmatprep.mubr.bf16.mxu0 0
        %408 = vmatmul.mubr.bf16.gmra.mrb[0].mxu0 %v373
        %v409 = vpop.f32.mrb[0].mxu0
        %v410 = vadd.f32 %v344, %v409
        %v411 = vpop.f32.mrb[0].mxu0
        %v412 = vadd.f32 %v348, %v411
        %v413 = vpop.f32.mrb[0].mxu0
        %v414 = vadd.f32 %v344, %v413
        %v415 = vpop.f32.mrb[0].mxu0
        %v416 = vadd.f32 %v348, %v415
        %417 = vdwg.mxu0
        %v418 = vmax.f32 %v410, 0.0
        %v419 = vmax.f32 %v412, 0.0
        %v420 = vmax.f32 %v414, 0.0
        %v421 = vmax.f32 %v416, 0.0
        %v422 = vpack.c.bf16 %v420, %v418
        %v423 = vpack.c.bf16 %v421, %v419
        %v424 = vld [vmem:[#allocation7] sm:$0xff]
        %v425 = vld [vmem:[#allocation7 + $0x8] sm:$0xff]
        %v426 = vld [vmem:[#allocation7 + $0x10] sm:$0xff]
        %v427 = vld [vmem:[#allocation7 + $0x18] sm:$0xff]
        %v428 = vld [vmem:[#allocation7 + $0x20] sm:$0xff]
        %v429 = vld [vmem:[#allocation7 + $0x28] sm:$0xff]
        %v430 = vld [vmem:[#allocation7 + $0x30] sm:$0xff]
        %v431 = vld [vmem:[#allocation7 + $0x38] sm:$0xff]
        %v432 = vld [vmem:[#allocation7 + $0x40] sm:$0xff]
        %v433 = vld [vmem:[#allocation7 + $0x48] sm:$0xff]
        %v434 = vld [vmem:[#allocation7 + $0x50] sm:$0xff]
        %v435 = vld [vmem:[#allocation7 + $0x58] sm:$0xff]
        %v436 = vld [vmem:[#allocation7 + $0x60] sm:$0xff]
        %v437 = vld [vmem:[#allocation7 + $0x68] sm:$0xff]
        %v438 = vld [vmem:[#allocation7 + $0x70] sm:$0xff]
        %v439 = vld [vmem:[#allocation7 + $0x78] sm:$0xff]
        %v440 = vld [vmem:[#allocation7 + $0x80] sm:$0xff]
        %v441 = vld [vmem:[#allocation7 + $0x88] sm:$0xff]
        %v442 = vld [vmem:[#allocation7 + $0x90] sm:$0xff]
        %v443 = vld [vmem:[#allocation7 + $0x98] sm:$0xff]
        %v444 = vld [vmem:[#allocation7 + $0xa0] sm:$0xff]
        %v445 = vld [vmem:[#allocation7 + $0xa8] sm:$0xff]
        %v446 = vld [vmem:[#allocation7 + $0xb0] sm:$0xff]
        %v447 = vld [vmem:[#allocation7 + $0xb8] sm:$0xff]
        %v448 = vld [vmem:[#allocation7 + $0xc0] sm:$0xff]
        %v449 = vld [vmem:[#allocation7 + $0xc8] sm:$0xff]
        %v450 = vld [vmem:[#allocation7 + $0xd0] sm:$0xff]
        %v451 = vld [vmem:[#allocation7 + $0xd8] sm:$0xff]
        %v452 = vld [vmem:[#allocation7 + $0xe0] sm:$0xff]
        %v453 = vld [vmem:[#allocation7 + $0xe8] sm:$0xff]
        %v454 = vld [vmem:[#allocation7 + $0xf0] sm:$0xff]
        %v455 = vld [vmem:[#allocation7 + $0xf8] sm:$0xff]
        %v456 = vld [vmem:[%s4] sm:$0x3]
        %v458 = vlaneseq
        %v459 = vshrl.u32 %v458, 7
        %v460 = vsub.s32 0, %v459
        %v461 = vrot.slane %v456, %v460
        %v462 = vlaneseq
        %v463 = vshrl.u32 %v462, 7
        %v464 = vsub.s32 1, %v463
        %v465 = vrot.slane %v456, %v464
        %v500 = vunpack.c.l.b16 %v424
        %v501 = vunpack.c.h.b16 %v424
        %v502 = vunpack.c.l.b16 %v425
        %v503 = vunpack.c.h.b16 %v425
        %v504 = vunpack.c.l.b16 %v426
        %v505 = vunpack.c.h.b16 %v426
        %v506 = vunpack.c.l.b16 %v427
        %v507 = vunpack.c.h.b16 %v427
        %v508 = vunpack.c.l.b16 %v428
        %v509 = vunpack.c.h.b16 %v428
        %v510 = vunpack.c.l.b16 %v429
        %v511 = vunpack.c.h.b16 %v429
        %v512 = vunpack.c.l.b16 %v430
        %v513 = vunpack.c.h.b16 %v430
        %v514 = vunpack.c.l.b16 %v431
        %v515 = vunpack.c.h.b16 %v431
        %v516 = vunpack.c.l.b16 %v432
        %v517 = vunpack.c.h.b16 %v432
        %v518 = vunpack.c.l.b16 %v433
        %v519 = vunpack.c.h.b16 %v433
        %v520 = vunpack.c.l.b16 %v434
        %v521 = vunpack.c.h.b16 %v434
        %v522 = vunpack.c.l.b16 %v435
        %v523 = vunpack.c.h.b16 %v435
        %v524 = vunpack.c.l.b16 %v436
        %v525 = vunpack.c.h.b16 %v436
        %v526 = vunpack.c.l.b16 %v437
        %v527 = vunpack.c.h.b16 %v437
        %v528 = vunpack.c.l.b16 %v438
        %v529 = vunpack.c.h.b16 %v438
        %v530 = vunpack.c.l.b16 %v439
        %v531 = vunpack.c.h.b16 %v439
        %v532 = vunpack.c.l.b16 %v440
        %v533 = vunpack.c.h.b16 %v440
        %v534 = vunpack.c.l.b16 %v441
        %v535 = vunpack.c.h.b16 %v441
        %v536 = vunpack.c.l.b16 %v442
        %v537 = vunpack.c.h.b16 %v442
        %v538 = vunpack.c.l.b16 %v443
        %v539 = vunpack.c.h.b16 %v443
        %v540 = vunpack.c.l.b16 %v444
        %v541 = vunpack.c.h.b16 %v444
        %v542 = vunpack.c.l.b16 %v445
        %v543 = vunpack.c.h.b16 %v445
        %v544 = vunpack.c.l.b16 %v446
        %v545 = vunpack.c.h.b16 %v446
        %v546 = vunpack.c.l.b16 %v447
        %v547 = vunpack.c.h.b16 %v447
        %v548 = vunpack.c.l.b16 %v448
        %v549 = vunpack.c.h.b16 %v448
        %v550 = vunpack.c.l.b16 %v449
        %v551 = vunpack.c.h.b16 %v449
        %v552 = vunpack.c.l.b16 %v450
        %v553 = vunpack.c.h.b16 %v450
        %v554 = vunpack.c.l.b16 %v451
        %v555 = vunpack.c.h.b16 %v451
        %v556 = vunpack.c.l.b16 %v452
        %v557 = vunpack.c.h.b16 %v452
        %v558 = vunpack.c.l.b16 %v453
        %v559 = vunpack.c.h.b16 %v453
        %v560 = vunpack.c.l.b16 %v454
        %v561 = vunpack.c.h.b16 %v454
        %v562 = vunpack.c.l.b16 %v455
        %v563 = vunpack.c.h.b16 %v455
        %v564 = vpack.c.b16 %v502, %v500
        %v565 = vpack.c.b16 %v503, %v501
        %v566 = vpack.c.b16 %v506, %v504
        %v567 = vpack.c.b16 %v507, %v505
        %v568 = vpack.c.b16 %v510, %v508
        %v569 = vpack.c.b16 %v511, %v509
        %v570 = vpack.c.b16 %v514, %v512
        %v571 = vpack.c.b16 %v515, %v513
        %v572 = vpack.c.b16 %v518, %v516
        %v573 = vpack.c.b16 %v519, %v517
        %v574 = vpack.c.b16 %v522, %v520
        %v575 = vpack.c.b16 %v523, %v521
        %v576 = vpack.c.b16 %v526, %v524
        %v577 = vpack.c.b16 %v527, %v525
        %v578 = vpack.c.b16 %v530, %v528
        %v579 = vpack.c.b16 %v531, %v529
        %v580 = vpack.c.b16 %v534, %v532
        %v581 = vpack.c.b16 %v535, %v533
        %v582 = vpack.c.b16 %v538, %v536
        %v583 = vpack.c.b16 %v539, %v537
        %v584 = vpack.c.b16 %v542, %v540
        %v585 = vpack.c.b16 %v543, %v541
        %v586 = vpack.c.b16 %v546, %v544
        %v587 = vpack.c.b16 %v547, %v545
        %v588 = vpack.c.b16 %v550, %v548
        %v589 = vpack.c.b16 %v551, %v549
        %v590 = vpack.c.b16 %v554, %v552
        %v591 = vpack.c.b16 %v555, %v553
        %v592 = vpack.c.b16 %v558, %v556
        %v593 = vpack.c.b16 %v559, %v557
        %v594 = vpack.c.b16 %v562, %v560
        %v595 = vpack.c.b16 %v563, %v561
        %628 = vmatprep.subr.bf16.mxu0 %v565
        %629 = vmatpush1.bf16.msra.mxu0 %v564
        %630 = vmatprep.subr.bf16.mxu0 %v567
        %631 = vmatpush1.bf16.msra.mxu0 %v566
        %632 = vmatprep.subr.bf16.mxu0 %v569
        %633 = vmatpush1.bf16.msra.mxu0 %v568
        %634 = vmatprep.subr.bf16.mxu0 %v571
        %635 = vmatpush1.bf16.msra.mxu0 %v570
        %636 = vmatprep.subr.bf16.mxu0 %v573
        %637 = vmatpush1.bf16.msra.mxu0 %v572
        %638 = vmatprep.subr.bf16.mxu0 %v575
        %639 = vmatpush1.bf16.msra.mxu0 %v574
        %640 = vmatprep.subr.bf16.mxu0 %v577
        %641 = vmatpush1.bf16.msra.mxu0 %v576
        %642 = vmatprep.subr.bf16.mxu0 %v579
        %643 = vmatpush1.bf16.msra.mxu0 %v578
        %644 = vmatprep.subr.bf16.mxu0 %v581
        %645 = vmatpush1.bf16.msra.mxu0 %v580
        %646 = vmatprep.subr.bf16.mxu0 %v583
        %647 = vmatpush1.bf16.msra.mxu0 %v582
        %648 = vmatprep.subr.bf16.mxu0 %v585
        %649 = vmatpush1.bf16.msra.mxu0 %v584
        %650 = vmatprep.subr.bf16.mxu0 %v587
        %651 = vmatpush1.bf16.msra.mxu0 %v586
        %652 = vmatprep.subr.bf16.mxu0 %v589
        %653 = vmatpush1.bf16.msra.mxu0 %v588
        %654 = vmatprep.subr.bf16.mxu0 %v591
        %655 = vmatpush1.bf16.msra.mxu0 %v590
        %656 = vmatprep.subr.bf16.mxu0 %v593
        %657 = vmatpush1.bf16.msra.mxu0 %v592
        %658 = vmatprep.subr.bf16.mxu0 %v595
        %659 = vmatpush1.bf16.msra.mxu0 %v594
        %660 = vmatprep.mubr.bf16.mxu0 %v423
        %661 = vmatmul.mubr.bf16.gmra.mrb[0].mxu0 %v422
        %v662 = vpop.f32.mrb[0].mxu0
        %v663 = vadd.f32 %v461, %v662
        %v664 = vpop.f32.mrb[0].mxu0
        %v665 = vadd.f32 %v465, %v664
        %v666 = vpop.f32.mrb[0].mxu0
        %v667 = vadd.f32 %v461, %v666
        %v668 = vpop.f32.mrb[0].mxu0
        %v669 = vadd.f32 %v465, %v668
        %670 = vdwg.mxu0
        %v671 = vmax.f32 %v663, 0.0
        %v672 = vmax.f32 %v665, 0.0
        %v673 = vmax.f32 %v667, 0.0
        %v674 = vmax.f32 %v669, 0.0
        %v675 = vld [vmem:[%s5] sm:$0x3]
        %v677 = vlaneseq
        %v678 = vshrl.u32 %v677, 7
        %v679 = vsub.s32 0, %v678
        %v680 = vrot.slane %v675, %v679
        %v681 = vlaneseq
        %v682 = vshrl.u32 %v681, 7
        %v683 = vsub.s32 1, %v682
        %v684 = vrot.slane %v675, %v683
        %v687 = vmul.f32 %v671, %v680
        %v688 = vmul.f32 %v672, %v684
        %v689 = vmul.f32 %v673, %v680
        %v690 = vmul.f32 %v674, %v684
        %v691 = vadd.f32 %v687, %v688
        %692 = vadd.xlane.f32.xlu0 %v691
        %v693 = vpop.xlane.xlu0 %692
        %v694 = vadd.f32 %v689, %v690
        %695 = vadd.xlane.f32.xlu0 %v694
        %v696 = vpop.xlane.xlu0 %695
        %s697 = sld [smem:[#allocation2]]
        %v698 = vstv %s697
        %v699 = vadd.f32 %v693, %v698
        %v700 = vadd.f32 %v696, %v698
        %vm701 = vcmask 7168
        %702 = vst.msk [vmem:[%s329] sm:$0xff] %vm701, %v699
        %703 = vst.msk [vmem:[%s329 + $0x8] sm:$0xff] %vm701, %v700
        %s704 = smul.u32 2, %s23
        %p705 = scmp.lt.s32.totalorder %s704, 3
        %s706 = scalar_select %p705, %s704, 3
        %s707 = smul.addr %s706, 8
        %s708 = scalar_lea.vmem %s7, %s707
        // Predicated region
        $region61: #{tpu_custom_call.1} parent=47 // pred_check
          %p709 = pneg %p193
        $region62: #{tpu_custom_call.1} parent=47 // pred_check_branch
          %711 = sbr.rel (%p709) target = $region64
        $region63: #{tpu_custom_call.1} parent=47 // pred_region
          %s712 = smul.u32 2, %s23
        $region64: #{tpu_custom_call.1} parent=47 // pred_fallthru
          _
      $region48: #{tpu_custom_call.1} parent=5 // pred_fallthru
        _
      %p713 = scmp.le.s32.totalorder 2, %s18
      // Predicated region
      $region65: #{tpu_custom_call.1} parent=5 // pred_check
        %p714 = pneg %p713
      $region66: #{tpu_custom_call.1} parent=5 // pred_check_branch
        %716 = sbr.rel (%p714) target = $region68
      $region67: #{tpu_custom_call.1} parent=5 // pred_region
        %s717 = ssub.s32 %s18, 2
        // Predicated region
        $region69: #{tpu_custom_call.1} parent=67 // pred_check
          %p718 = pneg %p199
        $region70: #{tpu_custom_call.1} parent=67 // pred_check_branch
          %720 = sbr.rel (%p718) target = $region72
        $region71: #{tpu_custom_call.1} parent=67 // pred_region
          %s721 = smul.u32 2, %s24
          %p722 = scmp.lt.s32.totalorder %s721, 3
          %s723 = scalar_select %p722, %s721, 3
          %s724 = smul.addr %s723, 8
          %s725 = scalar_lea.vmem %s7, %s724
        $region72: #{tpu_custom_call.1} parent=67 // pred_fallthru
          _
      $region68: #{tpu_custom_call.1} parent=5 // pred_fallthru
        _
    $region6: #{tpu_custom_call.1} parent=1 // loop_footer
      %s22 = sadd.s32 1, %s18
    $region7: #{tpu_custom_call.1} parent=1 // loop_footer_branch
      %17 = sbr.rel target = $region3
    $region8: #{tpu_custom_call.1} parent=1 // loop_exit
      _
    %726 = vsyncpa [#allocation4], 1
    %s727 = scalar_lea.sflag [#allocation4], 1
    %728 = vsyncpa %s727, 1
    %729 = vsyncpa [#allocation6], 1

</llo_original>
